<compile_context>
chip_gen: v6e
topology: v6e:2x2x1
jax: 0.10.0
libtpu: 0.0.40
codegen_flags: <defaults>
</compile_context>

<pallas_src>
import functools

import jax
import jax.numpy as jnp
from jax import lax
from jax.experimental import pallas as pl
from jax.experimental.pallas import tpu as pltpu


# ---------------------------------------------------------------------------
# Generic Pallas dense kernel: out = act(x @ w(.T) + b)
# ---------------------------------------------------------------------------
_TM_CAP = 256    # row-tile cap (sublane dim of the output)
_TN_CAP = 512    # col-tile cap (lane dim of the output), multiple of 128


def _round_up(a, m):
    return ((a + m - 1) // m) * m


def _dense_kernel(x_ref, w_ref, b_ref, o_ref, *, relu, rhs_transposed):
    x = x_ref[...]
    w = w_ref[...]
    if rhs_transposed:
        # w block is (TN, K): contract K-with-K directly (no glue transpose).
        acc = lax.dot_general(x, w, (((1,), (1,)), ((), ())),
                              preferred_element_type=jnp.float32)
    else:
        # w block is (K, TN).
        acc = jnp.dot(x, w, preferred_element_type=jnp.float32)
    acc = acc + b_ref[...]
    if relu:
        acc = jnp.maximum(acc, 0.0)
    o_ref[...] = acc.astype(o_ref.dtype)


def pallas_dense(x, w, b, *, relu, rhs_transposed, bias_per_row=False,
                 out_dtype=jnp.float32):
    """out = act(x @ w.T + b) if rhs_transposed else act(x @ w + b).

    x: (M, K).  w: (N, K) if rhs_transposed else (K, N).
    b: (M,) if bias_per_row (broadcast along columns) else (N,).
    Operands are cast to bf16; accumulation is f32; output dtype = out_dtype.
    """
    M, K = x.shape
    N = w.shape[0] if rhs_transposed else w.shape[1]

    tm = M if M <= _TM_CAP else _TM_CAP
    tn = N if N <= _TN_CAP else _TN_CAP
    Mp = M if tm == M else _round_up(M, tm)
    Np = N if tn == N else _round_up(N, tn)

    xb = x.astype(jnp.bfloat16)
    wb = w.astype(jnp.bfloat16)
    bf = b.astype(jnp.float32)

    if Mp != M:
        xb = jnp.pad(xb, ((0, Mp - M), (0, 0)))
    if Np != N:
        if rhs_transposed:
            wb = jnp.pad(wb, ((0, Np - N), (0, 0)))
        else:
            wb = jnp.pad(wb, ((0, 0), (0, Np - N)))

    if bias_per_row:
        b2 = bf.reshape(M, 1)
        if Mp != M:
            b2 = jnp.pad(b2, ((0, Mp - M), (0, 0)))
        b_spec = pl.BlockSpec((tm, 1), lambda i, j: (i, 0))
    else:
        b2 = bf.reshape(1, N)
        if Np != N:
            b2 = jnp.pad(b2, ((0, 0), (0, Np - N)))
        b_spec = pl.BlockSpec((1, tn), lambda i, j: (0, j))

    if rhs_transposed:
        w_spec = pl.BlockSpec((tn, K), lambda i, j: (j, 0))
    else:
        w_spec = pl.BlockSpec((K, tn), lambda i, j: (0, j))

    grid = (Mp // tm, Np // tn)
    out = pl.pallas_call(
        functools.partial(_dense_kernel, relu=relu,
                          rhs_transposed=rhs_transposed),
        out_shape=jax.ShapeDtypeStruct((Mp, Np), out_dtype),
        grid=grid,
        in_specs=[
            pl.BlockSpec((tm, K), lambda i, j: (i, 0)),
            w_spec,
            b_spec,
        ],
        out_specs=pl.BlockSpec((tm, tn), lambda i, j: (i, j)),
        compiler_params=pltpu.CompilerParams(
            dimension_semantics=("parallel", "parallel")),
    )(xb, wb, b2)

    if Mp != M or Np != N:
        out = out[:M, :N]
    return out


# ---------------------------------------------------------------------------
# Conv via channel-major im2col + lane-dense Pallas matmul
# ---------------------------------------------------------------------------
def _im2col_cm(a, k, s):
    """a: (C, B, H, W) channel-major -> patches (C*k*k, B*Ho*Wo).

    Row order is (c, kh, kw) (matches OIHW weight flattening), column order is
    (b, ho, wo).
    """
    C, B, H, W = a.shape
    Ho = (H - k) // s + 1
    Wo = (W - k) // s + 1
    cols = []
    for kh in range(k):
        for kw in range(k):
            cols.append(a[:, :, kh:kh + s * Ho:s, kw:kw + s * Wo:s])  # (C,B,Ho,Wo)
    p = jnp.stack(cols, axis=1)                       # (C, k*k, B, Ho, Wo)
    return p.reshape(C * k * k, B * Ho * Wo), Ho, Wo


def conv2d_relu_cm(a_cm, w, b, stride):
    """Valid conv + bias + ReLU in channel-major layout.

    a_cm: (Cin, B, H, W);  w: (Cout, Cin, k, k) (OIHW);  returns (Cout, B, Ho, Wo).
    """
    Cout, Cin, k, _ = w.shape
    _, B, _, _ = a_cm.shape
    patches, Ho, Wo = _im2col_cm(a_cm, k, stride)     # (Cin*k*k, B*Ho*Wo)
    w2 = w.reshape(Cout, Cin * k * k)
    # Lane-dense output: (Cout, B*Ho*Wo).  Weight is the (small) LHS and stays
    # resident; the patch columns stream through the N-tiled grid.
    out = pallas_dense(w2, patches, b, relu=True, rhs_transposed=False,
                       bias_per_row=True, out_dtype=jnp.bfloat16)
    return out.reshape(Cout, B, Ho, Wo)


# ---------------------------------------------------------------------------
# HyperDQNWithPrior forward
# ---------------------------------------------------------------------------
def hyper_dqn_forward(params, x, z, *, num_action, bias_coef):
    x = x.astype(jnp.float32)
    z = z.astype(jnp.float32)
    B = x.shape[0]

    # Channel-major (C, B, H, W) layout for the whole conv stack.
    a = jnp.transpose(x.astype(jnp.bfloat16), (1, 0, 2, 3))
    a = conv2d_relu_cm(a, params["conv1_w"], params["conv1_b"], 4)
    a = conv2d_relu_cm(a, params["conv2_w"], params["conv2_b"], 2)
    a = conv2d_relu_cm(a, params["conv3_w"], params["conv3_b"], 1)

    # Back to NCHW flatten order (C slowest, then H, then W) for the fc layer.
    flat = jnp.transpose(a, (1, 0, 2, 3)).reshape(B, -1)
    feature = pallas_dense(flat, params["fc_w"], params["fc_b"],
                           relu=True, rhs_transposed=True,
                           out_dtype=jnp.bfloat16)                 # (B, 512)

    # hypermodel: params_k = W_prior @ z_k + b_prior   -> (K, A*(512+1))
    hyper = pallas_dense(z, params["hyper_w"], params["hyper_b"],
                         relu=False, rhs_transposed=True)          # f32

    K = z.shape[0]
    A = num_action
    head_w = hyper[:, : A * 512].reshape(K * A, 512)               # (K*A, 512)
    head_b = (hyper[:, A * 512:] * bias_coef).reshape(K * A)       # (K*A,)

    # All ensemble Q heads fused into a single matmul: (B, K*A).
    q = pallas_dense(feature, head_w, head_b, relu=False, rhs_transposed=True)
    q = q.reshape(B, K, A)
    if K == 1:
        q = q[:, 0, :]
    return q


# ---------------------------------------------------------------------------
# Plain-JAX reference (for correctness check)
# ---------------------------------------------------------------------------
def reference_forward(params, x, z, *, num_action, bias_coef):
    def conv(x_, w, b, s):
        y = lax.conv_general_dilated(
            x_, w, (s, s), "VALID",
            dimension_numbers=("NCHW", "OIHW", "NCHW"))
        return jax.nn.relu(y + b[None, :, None, None])

    h = conv(x, params["conv1_w"], params["conv1_b"], 4)
    h = conv(h, params["conv2_w"], params["conv2_b"], 2)
    h = conv(h, params["conv3_w"], params["conv3_b"], 1)
    flat = h.reshape(h.shape[0], -1)
    feature = jax.nn.relu(flat @ params["fc_w"].T + params["fc_b"])
    hyper = z @ params["hyper_w"].T + params["hyper_b"]
    K, A = z.shape[0], num_action
    hw = hyper[:, : A * 512].reshape(K, A, 512)
    hb = hyper[:, A * 512:] * bias_coef
    q = jnp.einsum("bd,kad->bka", feature, hw) + hb[None]
    if K == 1:
        q = q[:, 0, :]
    return q


def _dense_ref(x, w, b, *, relu, rhs_transposed, bias_per_row):
    xf = x.astype(jnp.bfloat16).astype(jnp.float32)
    wf = w.astype(jnp.bfloat16).astype(jnp.float32)
    out = xf @ (wf.T if rhs_transposed else wf)
    out = out + (b[:, None] if bias_per_row else b[None, :])
    if relu:
        out = jnp.maximum(out, 0.0)
    return out


# ---------------------------------------------------------------------------
# Deterministic parameter init (mirrors module __init__ shapes)
# ---------------------------------------------------------------------------
def init_params(key, c, h, w, num_action, z_size, prior_mean=0.0, prior_std=1.0):
    ks = jax.random.split(key, 10)

    def conv_init(k, cout, cin, ksz):
        fan_in = cin * ksz * ksz
        return jax.random.normal(k, (cout, cin, ksz, ksz), jnp.float32) / jnp.sqrt(fan_in)

    h1, w1 = (h - 8) // 4 + 1, (w - 8) // 4 + 1
    h2, w2 = (h1 - 4) // 2 + 1, (w1 - 4) // 2 + 1
    h3, w3 = (h2 - 3) // 1 + 1, (w2 - 3) // 1 + 1
    cnn_output_dim = 64 * h3 * w3

    output_dim = num_action * (512 + 1)
    hyper_w = jax.random.normal(ks[8], (output_dim, z_size), jnp.float32)
    hyper_w = hyper_w / jnp.linalg.norm(hyper_w, axis=1, keepdims=True)
    hyper_w = (jnp.eye(output_dim, dtype=jnp.float32) * prior_std) @ hyper_w
    hyper_b = jnp.ones((output_dim,), jnp.float32) * prior_mean

    params = {
        "conv1_w": conv_init(ks[0], 32, c, 8),
        "conv1_b": 0.01 * jax.random.normal(ks[1], (32,), jnp.float32),
        "conv2_w": conv_init(ks[2], 64, 32, 4),
        "conv2_b": 0.01 * jax.random.normal(ks[3], (64,), jnp.float32),
        "conv3_w": conv_init(ks[4], 64, 64, 3),
        "conv3_b": 0.01 * jax.random.normal(ks[5], (64,), jnp.float32),
        "fc_w": jax.random.normal(ks[6], (512, cnn_output_dim), jnp.float32)
                / jnp.sqrt(cnn_output_dim),
        "fc_b": 0.01 * jax.random.normal(ks[7], (512,), jnp.float32),
        "hyper_w": hyper_w,
        "hyper_b": hyper_b,
    }
    return params


# ---------------------------------------------------------------------------
if __name__ == "__main__":
    key = jax.random.PRNGKey(0)

    # --- 1) Direct checks of the tiled dense kernel (M- and N-tiling paths) ---
    k1, k2, k3, key = jax.random.split(key, 4)
    xt = jax.random.normal(k1, (300, 64), jnp.float32)
    wt = jax.random.normal(k2, (640, 64), jnp.float32)
    bt = 0.01 * jax.random.normal(k3, (640,), jnp.float32)
    got = jax.block_until_ready(
        pallas_dense(xt, wt, bt, relu=True, rhs_transposed=True))
    ref = _dense_ref(xt, wt, bt, relu=True, rhs_transposed=True, bias_per_row=False)
    assert jnp.allclose(got, ref, rtol=2e-2, atol=2e-2), \
        f"dense t1 max abs diff {jnp.max(jnp.abs(got - ref))}"

    k1, k2, k3, key = jax.random.split(key, 4)
    xt = jax.random.normal(k1, (32, 128), jnp.float32)
    wt = jax.random.normal(k2, (128, 700), jnp.float32)
    bt = 0.01 * jax.random.normal(k3, (32,), jnp.float32)
    got = jax.block_until_ready(
        pallas_dense(xt, wt, bt, relu=True, rhs_transposed=False,
                     bias_per_row=True))
    ref = _dense_ref(xt, wt, bt, relu=True, rhs_transposed=False, bias_per_row=True)
    assert jnp.allclose(got, ref, rtol=2e-2, atol=2e-2), \
        f"dense t2 max abs diff {jnp.max(jnp.abs(got - ref))}"

    # --- 2) Full HyperDQNWithPrior forward at small shapes ---
    # Spatial must survive the 8/4, 4/2, 3/1 conv chain -> 36 is the minimum.
    B, C, H, W = 2, 4, 36, 36
    A = 4                 # num_action
    Z = 8                 # z_size
    K = 3                 # ensemble size (number of z samples)
    bias_coef = 0.01

    k_par, k_x, k_z = jax.random.split(key, 3)
    params = init_params(k_par, C, H, W, A, Z)
    x = jax.random.normal(k_x, (B, C, H, W), jnp.float32)
    z = jax.random.normal(k_z, (K, Z), jnp.float32)

    fwd = jax.jit(functools.partial(hyper_dqn_forward, num_action=A,
                                    bias_coef=bias_coef))
    q = jax.block_until_ready(fwd(params, x, z))

    q_ref = reference_forward(params, x, z, num_action=A, bias_coef=bias_coef)
    assert q.shape == (B, K, A), q.shape
    assert jnp.allclose(q, q_ref, rtol=4e-2, atol=4e-2), \
        f"max abs diff {jnp.max(jnp.abs(q - q_ref))}"

    # also exercise the K == 1 squeeze path
    q1 = jax.block_until_ready(fwd(params, x, z[:1]))
    assert q1.shape == (B, A), q1.shape

    print("KERNEL_OK")
</pallas_src>

<mosaic_0001>
module attributes {stable_mosaic.version = 11 : i64} {
  func.func @_dense_kernel(%arg0: i32, %arg1: i32, %arg2: memref<256x64xbf16, #tpu.memory_space<vmem>>, %arg3: memref<512x64xbf16, #tpu.memory_space<vmem>>, %arg4: memref<1x512xf32, #tpu.memory_space<vmem>>, %arg5: memref<256x512xf32, #tpu.memory_space<vmem>>) attributes {dimension_semantics = [#tpu.dimension_semantics<parallel>, #tpu.dimension_semantics<parallel>], iteration_bounds = array<i64: 2, 2>, scalar_prefetch = 0 : i64, scratch_operands = 0 : i64, tpu.core_type = #tpu.core_type<tc>, window_params = [{transform_indices = @transform_0, window_bounds = array<i64: 256, 64>}, {transform_indices = @transform_1, window_bounds = array<i64: 512, 64>}, {transform_indices = @transform_2, window_bounds = array<i64: 1, 512>}, {transform_indices = @transform_3, window_bounds = array<i64: 256, 512>}]} {
    %c0 = arith.constant 0 : index
    %c0_0 = arith.constant 0 : index
    %0 = vector.load %arg2[%c0, %c0_0] : memref<256x64xbf16, #tpu.memory_space<vmem>>, vector<256x64xbf16>
    %c0_1 = arith.constant 0 : index
    %c0_2 = arith.constant 0 : index
    %1 = vector.load %arg3[%c0_1, %c0_2] : memref<512x64xbf16, #tpu.memory_space<vmem>>, vector<512x64xbf16>
    %cst = arith.constant dense<0.000000e+00> : vector<256x512xf32>
    %2 = tpu.matmul %0, %1, %cst {dimension_numbers = #tpu.dot_dimension_numbers<[1], [1], [0], [0], [0, 0, 1, 0], [], []>} : vector<256x64xbf16>, vector<512x64xbf16>, vector<256x512xf32> -> vector<256x512xf32>
    %c0_3 = arith.constant 0 : index
    %c0_4 = arith.constant 0 : index
    %3 = vector.load %arg4[%c0_3, %c0_4] : memref<1x512xf32, #tpu.memory_space<vmem>>, vector<1x512xf32>
    %4 = vector.broadcast %3 : vector<1x512xf32> to vector<256x512xf32>
    %5 = arith.addf %2, %4 : vector<256x512xf32>
    %cst_5 = arith.constant 0.000000e+00 : f32
    %6 = vector.broadcast %cst_5 : f32 to vector<256x512xf32>
    %7 = arith.maximumf %5, %6 : vector<256x512xf32>
    %c0_6 = arith.constant 0 : index
    %c0_7 = arith.constant 0 : index
    %8 = vector.load %arg5[%c0_6, %c0_7] : memref<256x512xf32, #tpu.memory_space<vmem>>, vector<256x512xf32>
    tpu.vector_store %arg5[%c0_6, %c0_7], %7 {strides = array<i32>} : memref<256x512xf32, #tpu.memory_space<vmem>>, vector<256x512xf32>,
    return
  }
  func.func @transform_0(%arg0: i32, %arg1: i32) -> (i32, i32) {
    %c0_i32 = arith.constant 0 : i32
    %c0_i32_0 = arith.constant 0 : i32
    return %arg0, %c0_i32 : i32, i32
  }
  func.func @transform_1(%arg0: i32, %arg1: i32) -> (i32, i32) {
    %c0_i32 = arith.constant 0 : i32
    %c0_i32_0 = arith.constant 0 : i32
    return %arg1, %c0_i32 : i32, i32
  }
  func.func @transform_2(%arg0: i32, %arg1: i32) -> (i32, i32) {
    %c0_i32 = arith.constant 0 : i32
    %c0_i32_0 = arith.constant 0 : i32
    return %c0_i32, %arg1 : i32, i32
  }
  func.func @transform_3(%arg0: i32, %arg1: i32) -> (i32, i32) {
    %c0_i32 = arith.constant 0 : i32
    return %arg0, %arg1 : i32, i32
  }
}

</mosaic_0001>

<llo_original>
// kernel: tpu_custom_call.1
$region0: #{tpu_custom_call.1}
  #allocation0 [shape = 'u32[]', space=smem, size = 0x4, offset = 0x4, fixed_abs, tag = 'smem constant byte address 0x4 - core index']
  #allocation1 [shape = 'u32[144,128]{1,0:T(1,128)}', space=vmem, size = 0x12000, scoped, tag = 'internal scratch']
  %s0 = inlined_call_operand.vmem [shape: bf16[512,64], index: 0, kind: input, shape index: {}]
  %s1 = inlined_call_operand.vmem [shape: bf16[1024,64], index: 1, kind: input, shape index: {}]
  %s2 = inlined_call_operand.hbm [shape: f32[1,1024], index: 2, kind: input, shape index: {}]
  %s3 = inlined_call_operand.hbm [shape: f32[512,1024], index: 3, kind: output, shape index: {}]
  %s4 = sld [smem:[#allocation0]]
  $region49: #{tpu_custom_call.1} parent=0
    _
  %s6 = ssub.s32 1, %s4
  %s7 = scalar_select 0, %s6, %s4
  $region1: #{tpu_custom_call.1} parent=0
    #allocation2 [shape = 'u8[4096]{0}', space=vmem, size = 0x1000, scoped, tag = 'input window, operand 2']
    #allocation3 [shape = 's32[2]{0}', space=sflag, size = 0x8, scoped, tag = 'scoped memory for tpu_custom_call.1']
    #allocation4 [shape = 's32[2]{0}', space=sflag, size = 0x8, scoped, tag = 'scoped memory for tpu_custom_call.1']
    #allocation5 [shape = 'u8[1048576]{0}', space=vmem, size = 0x100000, scoped, tag = 'output window, operand 0']
    %8 = vsyncpa [#allocation3], 0
    %s9 = scalar_lea.sflag [#allocation3], 1
    %10 = vsyncpa %s9, 0
    %11 = vsyncpa [#allocation4], 0
    %s12 = scalar_lea.sflag [#allocation4], 1
    %13 = vsyncpa %s12, 0
    loop: start=0, step=1, limit=6
    $region2: #{tpu_custom_call.1} parent=1 // loop_pre_header
      _
    $region3: #{tpu_custom_call.1} parent=1 // loop_header
      %s15 = sphi 0, %s19
      %p16 = scmp.ge.s32.totalorder %s15, 6
      %s22 = sphi 0, %s34
      %s23 = sphi 0, %s30
      %s24 = sphi 0, %s22
      %s25 = sphi 0, %s23
      %s26 = sphi 0, %s24
      %s27 = sphi 0, %s25
      %s37 = sphi 0, %s39
      %s40 = sphi 0, %s37
      %s41 = sphi 0, %s40
      %s57 = sphi 0, %s41
      %s63 = sphi 0, %s65
      %s66 = sphi 0, %s63
      %s67 = sphi 0, %s66
      %s83 = sphi 0, %s67
      %s89 = sphi 0, %s91
      %s92 = sphi 0, %s89
      %s93 = sphi 0, %s92
      %s109 = sphi 0, %s93
      %s117 = sphi 0, %s119
      %s120 = sphi 0, %s117
      %s121 = sphi 0, %s120
      %s137 = sphi 0, %s121
    $region4: #{tpu_custom_call.1} parent=1 // loop_header_branch
      %18 = sbr.rel (%p16) target = $region8
    $region5: #{tpu_custom_call.1} parent=1 // loop_body
      %s20 = ssub.s32 %s15, 1
      %s21 = ssub.s32 %s15, 2
      %s28 = sadd.s32 1, %s23
      %p29 = scmp.ge.s32.totalorder %s28, 2
      %s30 = scalar_select %p29, 0, %s28
      %s31 = sadd.s32 1, %s22
      %s32 = scalar_select %p29, %s31, %s22
      %p33 = scmp.ge.s32.totalorder %s32, 2
      %s34 = scalar_select %p33, 0, %s32
      %s35 = ssub.s32 %s22, %s34
      %p36 = scmp.eq.s32.totalorder %s35, 0
      %s38 = sadd.s32 %s37, 1
      %s39 = scalar_select %p36, %s37, %s38
      %p42 = pneg %p36
      %p43 = scmp.eq.s32.totalorder %s15, 3
      %p44 = por %p42, %p43
      %p45 = scmp.ne.s32.totalorder %s37, %s40
      %p46 = scmp.eq.s32.totalorder %s15, 0
      %p47 = por %p45, %p46
      %p48 = scmp.ne.s32.totalorder %s37, %s40
      %p49 = scmp.eq.s32.totalorder %s20, 3
      %p50 = por %p48, %p49
      %p51 = scmp.ne.s32.totalorder %s40, %s41
      %p52 = scmp.eq.s32.totalorder %s20, 0
      %p53 = por %p51, %p52
      %p54 = scmp.ne.s32.totalorder %s40, %s41
      %p55 = scmp.eq.s32.totalorder %s21, 3
      %p56 = por %p54, %p55
      %p58 = scmp.ne.s32.totalorder %s41, %s57
      %p59 = scmp.eq.s32.totalorder %s21, 0
      %p60 = por %p58, %p59
      %s61 = ssub.s32 %s23, %s30
      %p62 = scmp.eq.s32.totalorder %s61, 0
      %s64 = sadd.s32 %s63, 1
      %s65 = scalar_select %p62, %s63, %s64
      %p68 = pneg %p62
      %p69 = scmp.eq.s32.totalorder %s15, 3
      %p70 = por %p68, %p69
      %p71 = scmp.ne.s32.totalorder %s63, %s66
      %p72 = scmp.eq.s32.totalorder %s15, 0
      %p73 = por %p71, %p72
      %p74 = scmp.ne.s32.totalorder %s63, %s66
      %p75 = scmp.eq.s32.totalorder %s20, 3
      %p76 = por %p74, %p75
      %p77 = scmp.ne.s32.totalorder %s66, %s67
      %p78 = scmp.eq.s32.totalorder %s20, 0
      %p79 = por %p77, %p78
      %p80 = scmp.ne.s32.totalorder %s66, %s67
      %p81 = scmp.eq.s32.totalorder %s21, 3
      %p82 = por %p80, %p81
      %p84 = scmp.ne.s32.totalorder %s67, %s83
      %p85 = scmp.eq.s32.totalorder %s21, 0
      %p86 = por %p84, %p85
      %s87 = ssub.s32 %s23, %s30
      %p88 = scmp.eq.s32.totalorder %s87, 0
      %s90 = sadd.s32 %s89, 1
      %s91 = scalar_select %p88, %s89, %s90
      %p94 = pneg %p88
      %p95 = scmp.eq.s32.totalorder %s15, 3
      %p96 = por %p94, %p95
      %p97 = scmp.ne.s32.totalorder %s89, %s92
      %p98 = scmp.eq.s32.totalorder %s15, 0
      %p99 = por %p97, %p98
      %p100 = scmp.ne.s32.totalorder %s89, %s92
      %p101 = scmp.eq.s32.totalorder %s20, 3
      %p102 = por %p100, %p101
      %p103 = scmp.ne.s32.totalorder %s92, %s93
      %p104 = scmp.eq.s32.totalorder %s20, 0
      %p105 = por %p103, %p104
      %p106 = scmp.ne.s32.totalorder %s92, %s93
      %p107 = scmp.eq.s32.totalorder %s21, 3
      %p108 = por %p106, %p107
      %p110 = scmp.ne.s32.totalorder %s93, %s109
      %p111 = scmp.eq.s32.totalorder %s21, 0
      %p112 = por %p110, %p111
      %s113 = ssub.s32 %s22, %s34
      %s114 = ssub.s32 %s23, %s30
      %s115 = sor.u32 %s113, %s114
      %p116 = scmp.eq.s32.totalorder %s115, 0
      %s118 = sadd.s32 %s117, 1
      %s119 = scalar_select %p116, %s117, %s118
      %p122 = pneg %p116
      %p123 = scmp.eq.s32.totalorder %s15, 3
      %p124 = por %p122, %p123
      %p125 = scmp.ne.s32.totalorder %s117, %s120
      %p126 = scmp.eq.s32.totalorder %s15, 0
      %p127 = por %p125, %p126
      %p128 = scmp.ne.s32.totalorder %s117, %s120
      %p129 = scmp.eq.s32.totalorder %s20, 3
      %p130 = por %p128, %p129
      %p131 = scmp.ne.s32.totalorder %s120, %s121
      %p132 = scmp.eq.s32.totalorder %s20, 0
      %p133 = por %p131, %p132
      %p134 = scmp.ne.s32.totalorder %s120, %s121
      %p135 = scmp.eq.s32.totalorder %s21, 3
      %p136 = por %p134, %p135
      %p138 = scmp.ne.s32.totalorder %s121, %s137
      %p139 = scmp.eq.s32.totalorder %s21, 0
      %p140 = por %p138, %p139
      %p141 = scmp.le.s32.totalorder 1, %s15
      %p142 = scmp.lt.s32.totalorder %s15, 5
      %p143 = pnand %p141, %p142
      %p144 = pneg %p143
      // Predicated region
      $region9: #{tpu_custom_call.1} parent=5 // pred_check
        _
      $region10: #{tpu_custom_call.1} parent=5 // pred_check_branch
        %146 = sbr.rel (%p143) target = $region12
      $region11: #{tpu_custom_call.1} parent=5 // pred_region
        %s147 = ssub.s32 %s15, 1
      $region12: #{tpu_custom_call.1} parent=5 // pred_fallthru
        _
      %p148 = scmp.lt.s32.totalorder %s15, 4
      // Predicated region
      $region13: #{tpu_custom_call.1} parent=5 // pred_check
        %p149 = pneg %p148
      $region14: #{tpu_custom_call.1} parent=5 // pred_check_branch
        %151 = sbr.rel (%p149) target = $region16
      $region15: #{tpu_custom_call.1} parent=5 // pred_region
        // Predicated region
        $region17: #{tpu_custom_call.1} parent=15 // pred_check
          %p152 = pneg %p47
        $region18: #{tpu_custom_call.1} parent=15 // pred_check_branch
          %154 = sbr.rel (%p152) target = $region20
        $region19: #{tpu_custom_call.1} parent=15 // pred_region
          %s155 = smul.u32 32, %s22
          %p156 = scmp.lt.s32.totalorder %s155, 63
          %s157 = scalar_select %p156, %s155, 63
          %s158 = smul.addr %s157, 4
          %s159 = scalar_lea.vmem %s0, %s158
          %s160 = smul.u32 32, %s22
        $region20: #{tpu_custom_call.1} parent=15 // pred_fallthru
          _
        // Predicated region
        $region21: #{tpu_custom_call.1} parent=15 // pred_check
          %p161 = pneg %p73
        $region22: #{tpu_custom_call.1} parent=15 // pred_check_branch
          %163 = sbr.rel (%p161) target = $region24
        $region23: #{tpu_custom_call.1} parent=15 // pred_region
          %s164 = smul.u32 64, %s23
          %p165 = scmp.lt.s32.totalorder %s164, 127
          %s166 = scalar_select %p165, %s164, 127
          %s167 = smul.addr %s166, 4
          %s168 = scalar_lea.vmem %s1, %s167
          %s169 = smul.u32 64, %s23
        $region24: #{tpu_custom_call.1} parent=15 // pred_fallthru
          _
        // Predicated region
        $region25: #{tpu_custom_call.1} parent=15 // pred_check
          %p170 = pneg %p99
        $region26: #{tpu_custom_call.1} parent=15 // pred_check_branch
          %172 = sbr.rel (%p170) target = $region28
        $region27: #{tpu_custom_call.1} parent=15 // pred_region
          %s173 = sand.u32 %s89, 1
          %s174 = scalar_lea.sflag [#allocation3], %s173
          %s175 = sand.u32 %s89, 1
          %s176 = smul.addr %s175, 4
          %s177 = scalar_lea.vmem [#allocation2], %s176
          %s178 = smul.u32 4, %s23
          %s180 = ssub.s32 64, 64
          %181 = vsyncadd %s174, %s180
          %s182 = smul.addr %s178, 16
          %s183 = scalar_lea.hbm %s2, %s182
          %s185 = sshll.u32 %s177, 4
          %s186 = int_to_ptr.vmem [resolvable:$true] %s185
          %188 = dma.hbm_to_vmem [thread:$0]  %s183, 64, %s186, %s174
        $region28: #{tpu_custom_call.1} parent=15 // pred_fallthru
          _
      $region16: #{tpu_custom_call.1} parent=5 // pred_fallthru
        _
      %p189 = scmp.le.s32.totalorder 1, %s15
      %p190 = scmp.lt.s32.totalorder %s15, 5
      %p191 = pnand %p189, %p190
      %p192 = pneg %p191
      // Predicated region
      $region29: #{tpu_custom_call.1} parent=5 // pred_check
        _
      $region30: #{tpu_custom_call.1} parent=5 // pred_check_branch
        %194 = sbr.rel (%p191) target = $region32
      $region31: #{tpu_custom_call.1} parent=5 // pred_region
        %s195 = ssub.s32 %s15, 1
        %s196 = sand.u32 %s92, 1
        %s197 = scalar_lea.sflag [#allocation3], %s196
        %s198 = sand.u32 %s92, 1
        %s199 = smul.addr %s198, 4
        %s200 = scalar_lea.vmem [#allocation2], %s199
        // Predicated region
        $region33: #{tpu_custom_call.1} parent=31 // pred_check
          %p201 = pneg %p105
        $region34: #{tpu_custom_call.1} parent=31 // pred_check_branch
          %203 = sbr.rel (%p201) target = $region36
        $region35: #{tpu_custom_call.1} parent=31 // pred_region
          %204 = dma.done %s197, 64
        $region36: #{tpu_custom_call.1} parent=31 // pred_fallthru
          _
        %s205 = smul.u32 32, %s24
        %p206 = scmp.lt.s32.totalorder %s205, 63
        %s207 = scalar_select %p206, %s205, 63
        %s208 = smul.addr %s207, 4
        %s209 = scalar_lea.vmem %s0, %s208
        %p210 = pneg %p53
        %p211 = pneg %p50
        %s212 = smul.u32 64, %s25
        %p213 = scmp.lt.s32.totalorder %s212, 127
        %s214 = scalar_select %p213, %s212, 127
        %s215 = smul.addr %s214, 4
        %s216 = scalar_lea.vmem %s1, %s215
        %p217 = pneg %p79
        %p218 = pneg %p76
        %s219 = sand.u32 %s92, 1
        %s220 = scalar_lea.sflag [#allocation3], %s219
        %s221 = sand.u32 %s92, 1
        %s222 = smul.addr %s221, 4
        %s223 = scalar_lea.vmem [#allocation2], %s222
        %p224 = pneg %p105
        %p225 = pneg %p102
        %p226 = pneg %p133
        %p227 = pneg %p130
        %s228 = sand.u32 %s120, 1
        %s229 = scalar_lea.sflag [#allocation4], %s228
        %s230 = sand.u32 %s120, 1
        %s231 = smul.addr %s230, 1024
        %s232 = scalar_lea.vmem [#allocation5], %s231
        %s233 = smul.u32 32, %s24
        %p234 = scmp.lt.s32.totalorder %s233, 63
        %s235 = scalar_select %p234, %s233, 63
        %s236 = smul.addr %s235, 4
        %s237 = scalar_lea.vmem %s0, %s236
        %s238 = smul.u32 32, %s24
        %s239 = smul.u32 64, %s25
        %p240 = scmp.lt.s32.totalorder %s239, 127
        %s241 = scalar_select %p240, %s239, 127
        %s242 = smul.addr %s241, 4
        %s243 = scalar_lea.vmem %s1, %s242
        %s244 = smul.u32 64, %s25
        %s245 = smul.u32 4, %s25
        %s246 = smul.u32 32, %s24
        %s247 = smul.u32 4, %s25
        %v249 = vld [vmem:[%s237] sm:$0xf]
        %v250 = vld [vmem:[%s237 + $0x4] sm:$0xf]
        %v251 = vld [vmem:[%s237 + $0x8] sm:$0xf]
        %v252 = vld [vmem:[%s237 + $0xc] sm:$0xf]
        %v253 = vld [vmem:[%s237 + $0x10] sm:$0xf]
        %v254 = vld [vmem:[%s237 + $0x14] sm:$0xf]
        %v255 = vld [vmem:[%s237 + $0x18] sm:$0xf]
        %v256 = vld [vmem:[%s237 + $0x1c] sm:$0xf]
        %v257 = vld [vmem:[%s237 + $0x20] sm:$0xf]
        %v258 = vld [vmem:[%s237 + $0x24] sm:$0xf]
        %v259 = vld [vmem:[%s237 + $0x28] sm:$0xf]
        %v260 = vld [vmem:[%s237 + $0x2c] sm:$0xf]
        %v261 = vld [vmem:[%s237 + $0x30] sm:$0xf]
        %v262 = vld [vmem:[%s237 + $0x34] sm:$0xf]
        %v263 = vld [vmem:[%s237 + $0x38] sm:$0xf]
        %v264 = vld [vmem:[%s237 + $0x3c] sm:$0xf]
        %v265 = vld [vmem:[%s237 + $0x40] sm:$0xf]
        %v266 = vld [vmem:[%s237 + $0x44] sm:$0xf]
        %v267 = vld [vmem:[%s237 + $0x48] sm:$0xf]
        %v268 = vld [vmem:[%s237 + $0x4c] sm:$0xf]
        %v269 = vld [vmem:[%s237 + $0x50] sm:$0xf]
        %v270 = vld [vmem:[%s237 + $0x54] sm:$0xf]
        %v271 = vld [vmem:[%s237 + $0x58] sm:$0xf]
        %v272 = vld [vmem:[%s237 + $0x5c] sm:$0xf]
        %v273 = vld [vmem:[%s237 + $0x60] sm:$0xf]
        %v274 = vld [vmem:[%s237 + $0x64] sm:$0xf]
        %v275 = vld [vmem:[%s237 + $0x68] sm:$0xf]
        %v276 = vld [vmem:[%s237 + $0x6c] sm:$0xf]
        %v277 = vld [vmem:[%s237 + $0x70] sm:$0xf]
        %v278 = vld [vmem:[%s237 + $0x74] sm:$0xf]
        %v279 = vld [vmem:[%s237 + $0x78] sm:$0xf]
        %v280 = vld [vmem:[%s237 + $0x7c] sm:$0xf]
        %v281 = vld [vmem:[%s243] sm:$0xf]
        %v282 = vld [vmem:[%s243 + $0x4] sm:$0xf]
        %v283 = vld [vmem:[%s243 + $0x8] sm:$0xf]
        %v284 = vld [vmem:[%s243 + $0xc] sm:$0xf]
        %v285 = vld [vmem:[%s243 + $0x10] sm:$0xf]
        %v286 = vld [vmem:[%s243 + $0x14] sm:$0xf]
        %v287 = vld [vmem:[%s243 + $0x18] sm:$0xf]
        %v288 = vld [vmem:[%s243 + $0x1c] sm:$0xf]
        %v289 = vld [vmem:[%s243 + $0x20] sm:$0xf]
        %v290 = vld [vmem:[%s243 + $0x24] sm:$0xf]
        %v291 = vld [vmem:[%s243 + $0x28] sm:$0xf]
        %v292 = vld [vmem:[%s243 + $0x2c] sm:$0xf]
        %v293 = vld [vmem:[%s243 + $0x30] sm:$0xf]
        %v294 = vld [vmem:[%s243 + $0x34] sm:$0xf]
        %v295 = vld [vmem:[%s243 + $0x38] sm:$0xf]
        %v296 = vld [vmem:[%s243 + $0x3c] sm:$0xf]
        %v297 = vld [vmem:[%s243 + $0x40] sm:$0xf]
        %v298 = vld [vmem:[%s243 + $0x44] sm:$0xf]
        %v299 = vld [vmem:[%s243 + $0x48] sm:$0xf]
        %v300 = vld [vmem:[%s243 + $0x4c] sm:$0xf]
        %v301 = vld [vmem:[%s243 + $0x50] sm:$0xf]
        %v302 = vld [vmem:[%s243 + $0x54] sm:$0xf]
        %v303 = vld [vmem:[%s243 + $0x58] sm:$0xf]
        %v304 = vld [vmem:[%s243 + $0x5c] sm:$0xf]
        %v305 = vld [vmem:[%s243 + $0x60] sm:$0xf]
        %v306 = vld [vmem:[%s243 + $0x64] sm:$0xf]
        %v307 = vld [vmem:[%s243 + $0x68] sm:$0xf]
        %v308 = vld [vmem:[%s243 + $0x6c] sm:$0xf]
        %v309 = vld [vmem:[%s243 + $0x70] sm:$0xf]
        %v310 = vld [vmem:[%s243 + $0x74] sm:$0xf]
        %v311 = vld [vmem:[%s243 + $0x78] sm:$0xf]
        %v312 = vld [vmem:[%s243 + $0x7c] sm:$0xf]
        %v313 = vld [vmem:[%s243 + $0x80] sm:$0xf]
        %v314 = vld [vmem:[%s243 + $0x84] sm:$0xf]
        %v315 = vld [vmem:[%s243 + $0x88] sm:$0xf]
        %v316 = vld [vmem:[%s243 + $0x8c] sm:$0xf]
        %v317 = vld [vmem:[%s243 + $0x90] sm:$0xf]
        %v318 = vld [vmem:[%s243 + $0x94] sm:$0xf]
        %v319 = vld [vmem:[%s243 + $0x98] sm:$0xf]
        %v320 = vld [vmem:[%s243 + $0x9c] sm:$0xf]
        %v321 = vld [vmem:[%s243 + $0xa0] sm:$0xf]
        %v322 = vld [vmem:[%s243 + $0xa4] sm:$0xf]
        %v323 = vld [vmem:[%s243 + $0xa8] sm:$0xf]
        %v324 = vld [vmem:[%s243 + $0xac] sm:$0xf]
        %v325 = vld [vmem:[%s243 + $0xb0] sm:$0xf]
        %v326 = vld [vmem:[%s243 + $0xb4] sm:$0xf]
        %v327 = vld [vmem:[%s243 + $0xb8] sm:$0xf]
        %v328 = vld [vmem:[%s243 + $0xbc] sm:$0xf]
        %v329 = vld [vmem:[%s243 + $0xc0] sm:$0xf]
        %v330 = vld [vmem:[%s243 + $0xc4] sm:$0xf]
        %v331 = vld [vmem:[%s243 + $0xc8] sm:$0xf]
        %v332 = vld [vmem:[%s243 + $0xcc] sm:$0xf]
        %v333 = vld [vmem:[%s243 + $0xd0] sm:$0xf]
        %v334 = vld [vmem:[%s243 + $0xd4] sm:$0xf]
        %v335 = vld [vmem:[%s243 + $0xd8] sm:$0xf]
        %v336 = vld [vmem:[%s243 + $0xdc] sm:$0xf]
        %v337 = vld [vmem:[%s243 + $0xe0] sm:$0xf]
        %v338 = vld [vmem:[%s243 + $0xe4] sm:$0xf]
        %v339 = vld [vmem:[%s243 + $0xe8] sm:$0xf]
        %v340 = vld [vmem:[%s243 + $0xec] sm:$0xf]
        %v341 = vld [vmem:[%s243 + $0xf0] sm:$0xf]
        %v342 = vld [vmem:[%s243 + $0xf4] sm:$0xf]
        %v343 = vld [vmem:[%s243 + $0xf8] sm:$0xf]
        %v344 = vld [vmem:[%s243 + $0xfc] sm:$0xf]
        %v345 = vld [vmem:[%s200] sm:$0xf]
        %v347 = vlaneseq
        %v348 = vshrl.u32 %v347, 7
        %v349 = vsub.s32 0, %v348
        %v350 = vrot.slane %v345, %v349
        %v351 = vlaneseq
        %v352 = vshrl.u32 %v351, 7
        %v353 = vsub.s32 1, %v352
        %v354 = vrot.slane %v345, %v353
        %v355 = vlaneseq
        %v356 = vshrl.u32 %v355, 7
        %v357 = vsub.s32 2, %v356
        %v358 = vrot.slane %v345, %v357
        %v359 = vlaneseq
        %v360 = vshrl.u32 %v359, 7
        %v361 = vsub.s32 3, %v360
        %v362 = vrot.slane %v345, %v361
        %v399 = vunpack.c.l.b16 %v249
        %v400 = vunpack.c.l.b16 %v250
        %v401 = vunpack.c.l.b16 %v251
        %v402 = vunpack.c.l.b16 %v252
        %v403 = vunpack.c.l.b16 %v253
        %v404 = vunpack.c.l.b16 %v254
        %v405 = vunpack.c.l.b16 %v255
        %v406 = vunpack.c.l.b16 %v256
        %v407 = vunpack.c.l.b16 %v257
        %v408 = vunpack.c.l.b16 %v258
        %v409 = vunpack.c.l.b16 %v259
        %v410 = vunpack.c.l.b16 %v260
        %v411 = vunpack.c.l.b16 %v261
        %v412 = vunpack.c.l.b16 %v262
        %v413 = vunpack.c.l.b16 %v263
        %v414 = vunpack.c.l.b16 %v264
        %v415 = vunpack.c.l.b16 %v265
        %v416 = vunpack.c.l.b16 %v266
        %v417 = vunpack.c.l.b16 %v267
        %v418 = vunpack.c.l.b16 %v268
        %v419 = vunpack.c.l.b16 %v269
        %v420 = vunpack.c.l.b16 %v270
        %v421 = vunpack.c.l.b16 %v271
        %v422 = vunpack.c.l.b16 %v272
        %v423 = vunpack.c.l.b16 %v273
        %v424 = vunpack.c.l.b16 %v274
        %v425 = vunpack.c.l.b16 %v275
        %v426 = vunpack.c.l.b16 %v276
        %v427 = vunpack.c.l.b16 %v277
        %v428 = vunpack.c.l.b16 %v278
        %v429 = vunpack.c.l.b16 %v279
        %v430 = vunpack.c.l.b16 %v280
        %v431 = vpack.c.b16 %v400, %v399
        %v432 = vpack.c.b16 %v402, %v401
        %v433 = vpack.c.b16 %v404, %v403
        %v434 = vpack.c.b16 %v406, %v405
        %v435 = vpack.c.b16 %v408, %v407
        %v436 = vpack.c.b16 %v410, %v409
        %v437 = vpack.c.b16 %v412, %v411
        %v438 = vpack.c.b16 %v414, %v413
        %v439 = vpack.c.b16 %v416, %v415
        %v440 = vpack.c.b16 %v418, %v417
        %v441 = vpack.c.b16 %v420, %v419
        %v442 = vpack.c.b16 %v422, %v421
        %v443 = vpack.c.b16 %v424, %v423
        %v444 = vpack.c.b16 %v426, %v425
        %v445 = vpack.c.b16 %v428, %v427
        %v446 = vpack.c.b16 %v430, %v429
        %v511 = vunpack.c.l.b16 %v281
        %v512 = vunpack.c.l.b16 %v282
        %v513 = vunpack.c.l.b16 %v283
        %v514 = vunpack.c.l.b16 %v284
        %v515 = vunpack.c.l.b16 %v285
        %v516 = vunpack.c.l.b16 %v286
        %v517 = vunpack.c.l.b16 %v287
        %v518 = vunpack.c.l.b16 %v288
        %v519 = vunpack.c.l.b16 %v289
        %v520 = vunpack.c.l.b16 %v290
        %v521 = vunpack.c.l.b16 %v291
        %v522 = vunpack.c.l.b16 %v292
        %v523 = vunpack.c.l.b16 %v293
        %v524 = vunpack.c.l.b16 %v294
        %v525 = vunpack.c.l.b16 %v295
        %v526 = vunpack.c.l.b16 %v296
        %v527 = vunpack.c.l.b16 %v297
        %v528 = vunpack.c.l.b16 %v298
        %v529 = vunpack.c.l.b16 %v299
        %v530 = vunpack.c.l.b16 %v300
        %v531 = vunpack.c.l.b16 %v301
        %v532 = vunpack.c.l.b16 %v302
        %v533 = vunpack.c.l.b16 %v303
        %v534 = vunpack.c.l.b16 %v304
        %v535 = vunpack.c.l.b16 %v305
        %v536 = vunpack.c.l.b16 %v306
        %v537 = vunpack.c.l.b16 %v307
        %v538 = vunpack.c.l.b16 %v308
        %v539 = vunpack.c.l.b16 %v309
        %v540 = vunpack.c.l.b16 %v310
        %v541 = vunpack.c.l.b16 %v311
        %v542 = vunpack.c.l.b16 %v312
        %v543 = vunpack.c.l.b16 %v313
        %v544 = vunpack.c.l.b16 %v314
        %v545 = vunpack.c.l.b16 %v315
        %v546 = vunpack.c.l.b16 %v316
        %v547 = vunpack.c.l.b16 %v317
        %v548 = vunpack.c.l.b16 %v318
        %v549 = vunpack.c.l.b16 %v319
        %v550 = vunpack.c.l.b16 %v320
        %v551 = vunpack.c.l.b16 %v321
        %v552 = vunpack.c.l.b16 %v322
        %v553 = vunpack.c.l.b16 %v323
        %v554 = vunpack.c.l.b16 %v324
        %v555 = vunpack.c.l.b16 %v325
        %v556 = vunpack.c.l.b16 %v326
        %v557 = vunpack.c.l.b16 %v327
        %v558 = vunpack.c.l.b16 %v328
        %v559 = vunpack.c.l.b16 %v329
        %v560 = vunpack.c.l.b16 %v330
        %v561 = vunpack.c.l.b16 %v331
        %v562 = vunpack.c.l.b16 %v332
        %v563 = vunpack.c.l.b16 %v333
        %v564 = vunpack.c.l.b16 %v334
        %v565 = vunpack.c.l.b16 %v335
        %v566 = vunpack.c.l.b16 %v336
        %v567 = vunpack.c.l.b16 %v337
        %v568 = vunpack.c.l.b16 %v338
        %v569 = vunpack.c.l.b16 %v339
        %v570 = vunpack.c.l.b16 %v340
        %v571 = vunpack.c.l.b16 %v341
        %v572 = vunpack.c.l.b16 %v342
        %v573 = vunpack.c.l.b16 %v343
        %v574 = vunpack.c.l.b16 %v344
        %v575 = vpack.c.b16 %v512, %v511
        %v576 = vpack.c.b16 %v514, %v513
        %v577 = vpack.c.b16 %v516, %v515
        %v578 = vpack.c.b16 %v518, %v517
        %v579 = vpack.c.b16 %v520, %v519
        %v580 = vpack.c.b16 %v522, %v521
        %v581 = vpack.c.b16 %v524, %v523
        %v582 = vpack.c.b16 %v526, %v525
        %v583 = vpack.c.b16 %v528, %v527
        %v584 = vpack.c.b16 %v530, %v529
        %v585 = vpack.c.b16 %v532, %v531
        %v586 = vpack.c.b16 %v534, %v533
        %v587 = vpack.c.b16 %v536, %v535
        %v588 = vpack.c.b16 %v538, %v537
        %v589 = vpack.c.b16 %v540, %v539
        %v590 = vpack.c.b16 %v542, %v541
        %v591 = vpack.c.b16 %v544, %v543
        %v592 = vpack.c.b16 %v546, %v545
        %v593 = vpack.c.b16 %v548, %v547
        %v594 = vpack.c.b16 %v550, %v549
        %v595 = vpack.c.b16 %v552, %v551
        %v596 = vpack.c.b16 %v554, %v553
        %v597 = vpack.c.b16 %v556, %v555
        %v598 = vpack.c.b16 %v558, %v557
        %v599 = vpack.c.b16 %v560, %v559
        %v600 = vpack.c.b16 %v562, %v561
        %v601 = vpack.c.b16 %v564, %v563
        %v602 = vpack.c.b16 %v566, %v565
        %v603 = vpack.c.b16 %v568, %v567
        %v604 = vpack.c.b16 %v570, %v569
        %v605 = vpack.c.b16 %v572, %v571
        %v606 = vpack.c.b16 %v574, %v573
        %vm607 = vcmask 523264
        %v609 = vsel %vm607, %v431, 0
        %v612 = vsel %vm607, %v432, 0
        %v615 = vsel %vm607, %v433, 0
        %v618 = vsel %vm607, %v434, 0
        %v621 = vsel %vm607, %v435, 0
        %v624 = vsel %vm607, %v436, 0
        %v627 = vsel %vm607, %v437, 0
        %v630 = vsel %vm607, %v438, 0
        %v633 = vsel %vm607, %v439, 0
        %v636 = vsel %vm607, %v440, 0
        %v639 = vsel %vm607, %v441, 0
        %v642 = vsel %vm607, %v442, 0
        %v645 = vsel %vm607, %v443, 0
        %v648 = vsel %vm607, %v444, 0
        %v651 = vsel %vm607, %v445, 0
        %v654 = vsel %vm607, %v446, 0
        %v657 = vsel %vm607, %v575, 0
        %v660 = vsel %vm607, %v576, 0
        %v663 = vsel %vm607, %v577, 0
        %v666 = vsel %vm607, %v578, 0
        %v669 = vsel %vm607, %v579, 0
        %v672 = vsel %vm607, %v580, 0
        %v675 = vsel %vm607, %v581, 0
        %v678 = vsel %vm607, %v582, 0
        %v681 = vsel %vm607, %v583, 0
        %v684 = vsel %vm607, %v584, 0
        %v687 = vsel %vm607, %v585, 0
        %v690 = vsel %vm607, %v586, 0
        %v693 = vsel %vm607, %v587, 0
        %v696 = vsel %vm607, %v588, 0
        %v699 = vsel %vm607, %v589, 0
        %v702 = vsel %vm607, %v590, 0
        %v705 = vsel %vm607, %v591, 0
        %v708 = vsel %vm607, %v592, 0
        %v711 = vsel %vm607, %v593, 0
        %v714 = vsel %vm607, %v594, 0
        %v717 = vsel %vm607, %v595, 0
        %v720 = vsel %vm607, %v596, 0
        %v723 = vsel %vm607, %v597, 0
        %v726 = vsel %vm607, %v598, 0
        %v729 = vsel %vm607, %v599, 0
        %v732 = vsel %vm607, %v600, 0
        %v735 = vsel %vm607, %v601, 0
        %v738 = vsel %vm607, %v602, 0
        %v741 = vsel %vm607, %v603, 0
        %v744 = vsel %vm607, %v604, 0
        %v747 = vsel %vm607, %v605, 0
        %v750 = vsel %vm607, %v606, 0
        %752 = vmatprep.subr.bf16.mxu0 0
        %753 = vmatpush1.bf16.xpose.msra.mxu0 %v678
        %754 = vmatprep.subr.bf16.mxu0 0
        %755 = vmatpush1.bf16.xpose.msra.mxu0 %v675
        %756 = vmatprep.subr.bf16.mxu0 0
        %757 = vmatpush1.bf16.xpose.msra.mxu0 %v672
        %758 = vmatprep.subr.bf16.mxu0 0
        %759 = vmatpush1.bf16.xpose.msra.mxu0 %v669
        %760 = vmatprep.subr.bf16.mxu0 0
        %761 = vmatpush1.bf16.xpose.msra.mxu0 %v666
        %762 = vmatprep.subr.bf16.mxu0 0
        %763 = vmatpush1.bf16.xpose.msra.mxu0 %v663
        %764 = vmatprep.subr.bf16.mxu0 0
        %765 = vmatpush1.bf16.xpose.msra.mxu0 %v660
        %766 = vmatprep.subr.bf16.mxu0 0
        %767 = vmatpush1.bf16.xpose.msra.mxu0 %v657
        %768 = vmatprep.subr.bf16.mxu0 0
        %769 = vmatpush2.bf16.xpose.msra.mxu0 %v702
        %770 = vmatprep.subr.bf16.mxu0 0
        %771 = vmatpush2.bf16.xpose.msra.mxu0 %v699
        %772 = vmatprep.subr.bf16.mxu0 0
        %773 = vmatpush2.bf16.xpose.msra.mxu0 %v696
        %774 = vmatprep.subr.bf16.mxu0 0
        %775 = vmatpush2.bf16.xpose.msra.mxu0 %v693
        %776 = vmatprep.subr.bf16.mxu0 0
        %777 = vmatpush2.bf16.xpose.msra.mxu0 %v690
        %778 = vmatprep.subr.bf16.mxu0 0
        %779 = vmatpush2.bf16.xpose.msra.mxu0 %v687
        %780 = vmatprep.subr.bf16.mxu0 0
        %781 = vmatpush2.bf16.xpose.msra.mxu0 %v684
        %782 = vmatprep.subr.bf16.mxu0 0
        %783 = vmatpush2.bf16.xpose.msra.mxu0 %v681
        %784 = vmatprep.mubr.bf16.mxu0 0
        %785 = vmatmul.mubr.bf16.gmra.mxu0 %v609
        %v786 = vpop.f32.mrf.mxu0
        %v787 = vadd.f32 %v350, %v786
        %v788 = vpop.f32.mrf.mxu0
        %v789 = vadd.f32 %v354, %v788
        %v790 = vpop.f32.mrf.mxu0
        %v791 = vadd.f32 %v350, %v790
        %v792 = vpop.f32.mrf.mxu0
        %v793 = vadd.f32 %v354, %v792
        %794 = vmatprep.mubr.bf16.mxu0 0
        %795 = vmatmul.mubr.bf16.gmra.mxu0 %v612
        %v796 = vpop.f32.mrf.mxu0
        %v797 = vadd.f32 %v350, %v796
        %v798 = vpop.f32.mrf.mxu0
        %v799 = vadd.f32 %v354, %v798
        %v800 = vpop.f32.mrf.mxu0
        %v801 = vadd.f32 %v350, %v800
        %v802 = vpop.f32.mrf.mxu0
        %v803 = vadd.f32 %v354, %v802
        %804 = vmatprep.mubr.bf16.mxu0 0
        %805 = vmatmul.mubr.bf16.gmra.mxu0 %v615
        %v806 = vpop.f32.mrf.mxu0
        %v807 = vadd.f32 %v350, %v806
        %v808 = vpop.f32.mrf.mxu0
        %v809 = vadd.f32 %v354, %v808
        %v810 = vpop.f32.mrf.mxu0
        %v811 = vadd.f32 %v350, %v810
        %v812 = vpop.f32.mrf.mxu0
        %v813 = vadd.f32 %v354, %v812
        %814 = vmatprep.mubr.bf16.mxu0 0
        %815 = vmatmul.mubr.bf16.gmra.mxu0 %v618
        %v816 = vpop.f32.mrf.mxu0
        %v817 = vadd.f32 %v350, %v816
        %v818 = vpop.f32.mrf.mxu0
        %v819 = vadd.f32 %v354, %v818
        %v820 = vpop.f32.mrf.mxu0
        %v821 = vadd.f32 %v350, %v820
        %v822 = vpop.f32.mrf.mxu0
        %v823 = vadd.f32 %v354, %v822
        %824 = vmatprep.mubr.bf16.mxu0 0
        %825 = vmatmul.mubr.bf16.gmra.mxu0 %v621
        %v826 = vpop.f32.mrf.mxu0
        %v827 = vadd.f32 %v350, %v826
        %v828 = vpop.f32.mrf.mxu0
        %v829 = vadd.f32 %v354, %v828
        %v830 = vpop.f32.mrf.mxu0
        %v831 = vadd.f32 %v350, %v830
        %v832 = vpop.f32.mrf.mxu0
        %v833 = vadd.f32 %v354, %v832
        %834 = vmatprep.mubr.bf16.mxu0 0
        %835 = vmatmul.mubr.bf16.gmra.mxu0 %v624
        %v836 = vpop.f32.mrf.mxu0
        %v837 = vadd.f32 %v350, %v836
        %v838 = vpop.f32.mrf.mxu0
        %v839 = vadd.f32 %v354, %v838
        %v840 = vpop.f32.mrf.mxu0
        %v841 = vadd.f32 %v350, %v840
        %v842 = vpop.f32.mrf.mxu0
        %v843 = vadd.f32 %v354, %v842
        %844 = vmatprep.mubr.bf16.mxu0 0
        %845 = vmatmul.mubr.bf16.gmra.mxu0 %v627
        %v846 = vpop.f32.mrf.mxu0
        %v847 = vadd.f32 %v350, %v846
        %v848 = vpop.f32.mrf.mxu0
        %v849 = vadd.f32 %v354, %v848
        %v850 = vpop.f32.mrf.mxu0
        %v851 = vadd.f32 %v350, %v850
        %v852 = vpop.f32.mrf.mxu0
        %v853 = vadd.f32 %v354, %v852
        %854 = vmatprep.mubr.bf16.mxu0 0
        %855 = vmatmul.mubr.bf16.gmra.mxu0 %v630
        %v856 = vpop.f32.mrf.mxu0
        %v857 = vadd.f32 %v350, %v856
        %v858 = vpop.f32.mrf.mxu0
        %v859 = vadd.f32 %v354, %v858
        %v860 = vpop.f32.mrf.mxu0
        %v861 = vadd.f32 %v350, %v860
        %v862 = vpop.f32.mrf.mxu0
        %v863 = vadd.f32 %v354, %v862
        %864 = vmatprep.mubr.bf16.mxu0 0
        %865 = vmatmul.mubr.bf16.gmra.mxu0 %v633
        %v866 = vpop.f32.mrf.mxu0
        %v867 = vadd.f32 %v350, %v866
        %v868 = vpop.f32.mrf.mxu0
        %v869 = vadd.f32 %v354, %v868
        %v870 = vpop.f32.mrf.mxu0
        %v871 = vadd.f32 %v350, %v870
        %v872 = vpop.f32.mrf.mxu0
        %v873 = vadd.f32 %v354, %v872
        %874 = vmatprep.mubr.bf16.mxu0 0
        %875 = vmatmul.mubr.bf16.gmra.mxu0 %v636
        %v876 = vpop.f32.mrf.mxu0
        %v877 = vadd.f32 %v350, %v876
        %v878 = vpop.f32.mrf.mxu0
        %v879 = vadd.f32 %v354, %v878
        %v880 = vpop.f32.mrf.mxu0
        %v881 = vadd.f32 %v350, %v880
        %v882 = vpop.f32.mrf.mxu0
        %v883 = vadd.f32 %v354, %v882
        %884 = vmatprep.mubr.bf16.mxu0 0
        %885 = vmatmul.mubr.bf16.gmra.mxu0 %v639
        %v886 = vpop.f32.mrf.mxu0
        %v887 = vadd.f32 %v350, %v886
        %v888 = vpop.f32.mrf.mxu0
        %v889 = vadd.f32 %v354, %v888
        %v890 = vpop.f32.mrf.mxu0
        %v891 = vadd.f32 %v350, %v890
        %v892 = vpop.f32.mrf.mxu0
        %v893 = vadd.f32 %v354, %v892
        %894 = vmatprep.mubr.bf16.mxu0 0
        %895 = vmatmul.mubr.bf16.gmra.mxu0 %v642
        %v896 = vpop.f32.mrf.mxu0
        %v897 = vadd.f32 %v350, %v896
        %v898 = vpop.f32.mrf.mxu0
        %v899 = vadd.f32 %v354, %v898
        %v900 = vpop.f32.mrf.mxu0
        %v901 = vadd.f32 %v350, %v900
        %v902 = vpop.f32.mrf.mxu0
        %v903 = vadd.f32 %v354, %v902
        %904 = vmatprep.mubr.bf16.mxu0 0
        %905 = vmatmul.mubr.bf16.gmra.mxu0 %v645
        %v906 = vpop.f32.mrf.mxu0
        %v907 = vadd.f32 %v350, %v906
        %v908 = vpop.f32.mrf.mxu0
        %v909 = vadd.f32 %v354, %v908
        %v910 = vpop.f32.mrf.mxu0
        %v911 = vadd.f32 %v350, %v910
        %v912 = vpop.f32.mrf.mxu0
        %v913 = vadd.f32 %v354, %v912
        %914 = vmatprep.mubr.bf16.mxu0 0
        %915 = vmatmul.mubr.bf16.gmra.mxu0 %v648
        %v916 = vpop.f32.mrf.mxu0
        %v917 = vadd.f32 %v350, %v916
        %v918 = vpop.f32.mrf.mxu0
        %v919 = vadd.f32 %v354, %v918
        %v920 = vpop.f32.mrf.mxu0
        %v921 = vadd.f32 %v350, %v920
        %v922 = vpop.f32.mrf.mxu0
        %v923 = vadd.f32 %v354, %v922
        %924 = vmatprep.mubr.bf16.mxu0 0
        %925 = vmatmul.mubr.bf16.gmra.mxu0 %v651
        %v926 = vpop.f32.mrf.mxu0
        %v927 = vadd.f32 %v350, %v926
        %v928 = vpop.f32.mrf.mxu0
        %v929 = vadd.f32 %v354, %v928
        %v930 = vpop.f32.mrf.mxu0
        %v931 = vadd.f32 %v350, %v930
        %v932 = vpop.f32.mrf.mxu0
        %v933 = vadd.f32 %v354, %v932
        %934 = vmatprep.mubr.bf16.mxu0 0
        %935 = vmatmul.mubr.bf16.gmra.mxu0 %v654
        %v936 = vpop.f32.mrf.mxu0
        %v937 = vadd.f32 %v350, %v936
        %v938 = vpop.f32.mrf.mxu0
        %v939 = vadd.f32 %v354, %v938
        %v940 = vpop.f32.mrf.mxu0
        %v941 = vadd.f32 %v350, %v940
        %v942 = vpop.f32.mrf.mxu0
        %v943 = vadd.f32 %v354, %v942
        %944 = vdwg.mxu0
        %945 = vmatprep.subr.bf16.mxu0 0
        %946 = vmatpush1.bf16.xpose.msra.mxu0 %v726
        %947 = vmatprep.subr.bf16.mxu0 0
        %948 = vmatpush1.bf16.xpose.msra.mxu0 %v723
        %949 = vmatprep.subr.bf16.mxu0 0
        %950 = vmatpush1.bf16.xpose.msra.mxu0 %v720
        %951 = vmatprep.subr.bf16.mxu0 0
        %952 = vmatpush1.bf16.xpose.msra.mxu0 %v717
        %953 = vmatprep.subr.bf16.mxu0 0
        %954 = vmatpush1.bf16.xpose.msra.mxu0 %v714
        %955 = vmatprep.subr.bf16.mxu0 0
        %956 = vmatpush1.bf16.xpose.msra.mxu0 %v711
        %957 = vmatprep.subr.bf16.mxu0 0
        %958 = vmatpush1.bf16.xpose.msra.mxu0 %v708
        %959 = vmatprep.subr.bf16.mxu0 0
        %960 = vmatpush1.bf16.xpose.msra.mxu0 %v705
        %961 = vmatprep.subr.bf16.mxu0 0
        %962 = vmatpush2.bf16.xpose.msra.mxu0 %v750
        %963 = vmatprep.subr.bf16.mxu0 0
        %964 = vmatpush2.bf16.xpose.msra.mxu0 %v747
        %965 = vmatprep.subr.bf16.mxu0 0
        %966 = vmatpush2.bf16.xpose.msra.mxu0 %v744
        %967 = vmatprep.subr.bf16.mxu0 0
        %968 = vmatpush2.bf16.xpose.msra.mxu0 %v741
        %969 = vmatprep.subr.bf16.mxu0 0
        %970 = vmatpush2.bf16.xpose.msra.mxu0 %v738
        %971 = vmatprep.subr.bf16.mxu0 0
        %972 = vmatpush2.bf16.xpose.msra.mxu0 %v735
        %973 = vmatprep.subr.bf16.mxu0 0
        %974 = vmatpush2.bf16.xpose.msra.mxu0 %v732
        %975 = vmatprep.subr.bf16.mxu0 0
        %976 = vmatpush2.bf16.xpose.msra.mxu0 %v729
        %977 = vmatprep.mubr.bf16.mxu0 0
        %978 = vmatmul.mubr.bf16.gmra.mxu0 %v609
        %v979 = vpop.f32.mrf.mxu0
        %v980 = vadd.f32 %v358, %v979
        %v981 = vpop.f32.mrf.mxu0
        %v982 = vadd.f32 %v362, %v981
        %v983 = vpop.f32.mrf.mxu0
        %v984 = vadd.f32 %v358, %v983
        %v985 = vpop.f32.mrf.mxu0
        %v986 = vadd.f32 %v362, %v985
        %987 = vmatprep.mubr.bf16.mxu0 0
        %988 = vmatmul.mubr.bf16.gmra.mxu0 %v612
        %v989 = vpop.f32.mrf.mxu0
        %v990 = vadd.f32 %v358, %v989
        %v991 = vpop.f32.mrf.mxu0
        %v992 = vadd.f32 %v362, %v991
        %v993 = vpop.f32.mrf.mxu0
        %v994 = vadd.f32 %v358, %v993
        %v995 = vpop.f32.mrf.mxu0
        %v996 = vadd.f32 %v362, %v995
        %997 = vmatprep.mubr.bf16.mxu0 0
        %998 = vmatmul.mubr.bf16.gmra.mxu0 %v615
        %v999 = vpop.f32.mrf.mxu0
        %v1000 = vadd.f32 %v358, %v999
        %v1001 = vpop.f32.mrf.mxu0
        %v1002 = vadd.f32 %v362, %v1001
        %v1003 = vpop.f32.mrf.mxu0
        %v1004 = vadd.f32 %v358, %v1003
        %v1005 = vpop.f32.mrf.mxu0
        %v1006 = vadd.f32 %v362, %v1005
        %1007 = vmatprep.mubr.bf16.mxu0 0
        %1008 = vmatmul.mubr.bf16.gmra.mxu0 %v618
        %v1009 = vpop.f32.mrf.mxu0
        %v1010 = vadd.f32 %v358, %v1009
        %v1011 = vpop.f32.mrf.mxu0
        %v1012 = vadd.f32 %v362, %v1011
        %v1013 = vpop.f32.mrf.mxu0
        %v1014 = vadd.f32 %v358, %v1013
        %v1015 = vpop.f32.mrf.mxu0
        %v1016 = vadd.f32 %v362, %v1015
        %1017 = vmatprep.mubr.bf16.mxu0 0
        %1018 = vmatmul.mubr.bf16.gmra.mxu0 %v621
        %v1019 = vpop.f32.mrf.mxu0
        %v1020 = vadd.f32 %v358, %v1019
        %v1021 = vpop.f32.mrf.mxu0
        %v1022 = vadd.f32 %v362, %v1021
        %v1023 = vpop.f32.mrf.mxu0
        %v1024 = vadd.f32 %v358, %v1023
        %v1025 = vpop.f32.mrf.mxu0
        %v1026 = vadd.f32 %v362, %v1025
        %1027 = vmatprep.mubr.bf16.mxu0 0
        %1028 = vmatmul.mubr.bf16.gmra.mxu0 %v624
        %v1029 = vpop.f32.mrf.mxu0
        %v1030 = vadd.f32 %v358, %v1029
        %v1031 = vpop.f32.mrf.mxu0
        %v1032 = vadd.f32 %v362, %v1031
        %v1033 = vpop.f32.mrf.mxu0
        %v1034 = vadd.f32 %v358, %v1033
        %v1035 = vpop.f32.mrf.mxu0
        %v1036 = vadd.f32 %v362, %v1035
        %1037 = vmatprep.mubr.bf16.mxu0 0
        %1038 = vmatmul.mubr.bf16.gmra.mxu0 %v627
        %v1039 = vpop.f32.mrf.mxu0
        %v1040 = vadd.f32 %v358, %v1039
        %v1041 = vpop.f32.mrf.mxu0
        %v1042 = vadd.f32 %v362, %v1041
        %v1043 = vpop.f32.mrf.mxu0
        %v1044 = vadd.f32 %v358, %v1043
        %v1045 = vpop.f32.mrf.mxu0
        %v1046 = vadd.f32 %v362, %v1045
        %1047 = vmatprep.mubr.bf16.mxu0 0
        %1048 = vmatmul.mubr.bf16.gmra.mxu0 %v630
        %v1049 = vpop.f32.mrf.mxu0
        %v1050 = vadd.f32 %v358, %v1049
        %v1051 = vpop.f32.mrf.mxu0
        %v1052 = vadd.f32 %v362, %v1051
        %v1053 = vpop.f32.mrf.mxu0
        %v1054 = vadd.f32 %v358, %v1053
        %v1055 = vpop.f32.mrf.mxu0
        %v1056 = vadd.f32 %v362, %v1055
        %1057 = vmatprep.mubr.bf16.mxu0 0
        %1058 = vmatmul.mubr.bf16.gmra.mxu0 %v633
        %v1059 = vpop.f32.mrf.mxu0
        %v1060 = vadd.f32 %v358, %v1059
        %v1061 = vpop.f32.mrf.mxu0
        %v1062 = vadd.f32 %v362, %v1061
        %v1063 = vpop.f32.mrf.mxu0
        %v1064 = vadd.f32 %v358, %v1063
        %v1065 = vpop.f32.mrf.mxu0
        %v1066 = vadd.f32 %v362, %v1065
        %1067 = vmatprep.mubr.bf16.mxu0 0
        %1068 = vmatmul.mubr.bf16.gmra.mxu0 %v636
        %v1069 = vpop.f32.mrf.mxu0
        %v1070 = vadd.f32 %v358, %v1069
        %v1071 = vpop.f32.mrf.mxu0
        %v1072 = vadd.f32 %v362, %v1071
        %v1073 = vpop.f32.mrf.mxu0
        %v1074 = vadd.f32 %v358, %v1073
        %v1075 = vpop.f32.mrf.mxu0
        %v1076 = vadd.f32 %v362, %v1075
        %1077 = vmatprep.mubr.bf16.mxu0 0
        %1078 = vmatmul.mubr.bf16.gmra.mxu0 %v639
        %v1079 = vpop.f32.mrf.mxu0
        %v1080 = vadd.f32 %v358, %v1079
        %v1081 = vpop.f32.mrf.mxu0
        %v1082 = vadd.f32 %v362, %v1081
        %v1083 = vpop.f32.mrf.mxu0
        %v1084 = vadd.f32 %v358, %v1083
        %v1085 = vpop.f32.mrf.mxu0
        %v1086 = vadd.f32 %v362, %v1085
        %1087 = vmatprep.mubr.bf16.mxu0 0
        %1088 = vmatmul.mubr.bf16.gmra.mxu0 %v642
        %v1089 = vpop.f32.mrf.mxu0
        %v1090 = vadd.f32 %v358, %v1089
        %v1091 = vpop.f32.mrf.mxu0
        %v1092 = vadd.f32 %v362, %v1091
        %v1093 = vpop.f32.mrf.mxu0
        %v1094 = vadd.f32 %v358, %v1093
        %v1095 = vpop.f32.mrf.mxu0
        %v1096 = vadd.f32 %v362, %v1095
        %1097 = vmatprep.mubr.bf16.mxu0 0
        %1098 = vmatmul.mubr.bf16.gmra.mxu0 %v645
        %v1099 = vpop.f32.mrf.mxu0
        %v1100 = vadd.f32 %v358, %v1099
        %v1101 = vpop.f32.mrf.mxu0
        %v1102 = vadd.f32 %v362, %v1101
        %v1103 = vpop.f32.mrf.mxu0
        %v1104 = vadd.f32 %v358, %v1103
        %v1105 = vpop.f32.mrf.mxu0
        %v1106 = vadd.f32 %v362, %v1105
        %1107 = vmatprep.mubr.bf16.mxu0 0
        %1108 = vmatmul.mubr.bf16.gmra.mxu0 %v648
        %v1109 = vpop.f32.mrf.mxu0
        %v1110 = vadd.f32 %v358, %v1109
        %v1111 = vpop.f32.mrf.mxu0
        %v1112 = vadd.f32 %v362, %v1111
        %v1113 = vpop.f32.mrf.mxu0
        %v1114 = vadd.f32 %v358, %v1113
        %v1115 = vpop.f32.mrf.mxu0
        %v1116 = vadd.f32 %v362, %v1115
        %1117 = vmatprep.mubr.bf16.mxu0 0
        %1118 = vmatmul.mubr.bf16.gmra.mxu0 %v651
        %v1119 = vpop.f32.mrf.mxu0
        %v1120 = vadd.f32 %v358, %v1119
        %v1121 = vpop.f32.mrf.mxu0
        %v1122 = vadd.f32 %v362, %v1121
        %v1123 = vpop.f32.mrf.mxu0
        %v1124 = vadd.f32 %v358, %v1123
        %v1125 = vpop.f32.mrf.mxu0
        %v1126 = vadd.f32 %v362, %v1125
        %1127 = vmatprep.mubr.bf16.mxu0 0
        %1128 = vmatmul.mubr.bf16.gmra.mxu0 %v654
        %v1129 = vpop.f32.mrf.mxu0
        %v1130 = vadd.f32 %v358, %v1129
        %v1131 = vpop.f32.mrf.mxu0
        %v1132 = vadd.f32 %v362, %v1131
        %v1133 = vpop.f32.mrf.mxu0
        %v1134 = vadd.f32 %v358, %v1133
        %v1135 = vpop.f32.mrf.mxu0
        %v1136 = vadd.f32 %v362, %v1135
        %1137 = vdwg.mxu0
        %v1138 = vmax.f32 %v787, 0.0
        %v1139 = vmax.f32 %v789, 0.0
        %v1140 = vmax.f32 %v980, 0.0
        %v1141 = vmax.f32 %v982, 0.0
        %v1142 = vmax.f32 %v791, 0.0
        %v1143 = vmax.f32 %v793, 0.0
        %v1144 = vmax.f32 %v984, 0.0
        %v1145 = vmax.f32 %v986, 0.0
        %v1146 = vmax.f32 %v797, 0.0
        %v1147 = vmax.f32 %v799, 0.0
        %v1148 = vmax.f32 %v990, 0.0
        %v1149 = vmax.f32 %v992, 0.0
        %v1150 = vmax.f32 %v801, 0.0
        %v1151 = vmax.f32 %v803, 0.0
        %v1152 = vmax.f32 %v994, 0.0
        %v1153 = vmax.f32 %v996, 0.0
        %v1154 = vmax.f32 %v807, 0.0
        %v1155 = vmax.f32 %v809, 0.0
        %v1156 = vmax.f32 %v1000, 0.0
        %v1157 = vmax.f32 %v1002, 0.0
        %v1158 = vmax.f32 %v811, 0.0
        %v1159 = vmax.f32 %v813, 0.0
        %v1160 = vmax.f32 %v1004, 0.0
        %v1161 = vmax.f32 %v1006, 0.0
        %v1162 = vmax.f32 %v817, 0.0
        %v1163 = vmax.f32 %v819, 0.0
        %v1164 = vmax.f32 %v1010, 0.0
        %v1165 = vmax.f32 %v1012, 0.0
        %v1166 = vmax.f32 %v821, 0.0
        %v1167 = vmax.f32 %v823, 0.0
        %v1168 = vmax.f32 %v1014, 0.0
        %v1169 = vmax.f32 %v1016, 0.0
        %v1170 = vmax.f32 %v827, 0.0
        %v1171 = vmax.f32 %v829, 0.0
        %v1172 = vmax.f32 %v1020, 0.0
        %v1173 = vmax.f32 %v1022, 0.0
        %v1174 = vmax.f32 %v831, 0.0
        %v1175 = vmax.f32 %v833, 0.0
        %v1176 = vmax.f32 %v1024, 0.0
        %v1177 = vmax.f32 %v1026, 0.0
        %v1178 = vmax.f32 %v837, 0.0
        %v1179 = vmax.f32 %v839, 0.0
        %v1180 = vmax.f32 %v1030, 0.0
        %v1181 = vmax.f32 %v1032, 0.0
        %v1182 = vmax.f32 %v841, 0.0
        %v1183 = vmax.f32 %v843, 0.0
        %v1184 = vmax.f32 %v1034, 0.0
        %v1185 = vmax.f32 %v1036, 0.0
        %v1186 = vmax.f32 %v847, 0.0
        %v1187 = vmax.f32 %v849, 0.0
        %v1188 = vmax.f32 %v1040, 0.0
        %v1189 = vmax.f32 %v1042, 0.0
        %v1190 = vmax.f32 %v851, 0.0
        %v1191 = vmax.f32 %v853, 0.0
        %v1192 = vmax.f32 %v1044, 0.0
        %v1193 = vmax.f32 %v1046, 0.0
        %v1194 = vmax.f32 %v857, 0.0
        %v1195 = vmax.f32 %v859, 0.0
        %v1196 = vmax.f32 %v1050, 0.0
        %v1197 = vmax.f32 %v1052, 0.0
        %v1198 = vmax.f32 %v861, 0.0
        %v1199 = vmax.f32 %v863, 0.0
        %v1200 = vmax.f32 %v1054, 0.0
        %v1201 = vmax.f32 %v1056, 0.0
        %v1202 = vmax.f32 %v867, 0.0
        %v1203 = vmax.f32 %v869, 0.0
        %v1204 = vmax.f32 %v1060, 0.0
        %v1205 = vmax.f32 %v1062, 0.0
        %v1206 = vmax.f32 %v871, 0.0
        %v1207 = vmax.f32 %v873, 0.0
        %v1208 = vmax.f32 %v1064, 0.0
        %v1209 = vmax.f32 %v1066, 0.0
        %v1210 = vmax.f32 %v877, 0.0
        %v1211 = vmax.f32 %v879, 0.0
        %v1212 = vmax.f32 %v1070, 0.0
        %v1213 = vmax.f32 %v1072, 0.0
        %v1214 = vmax.f32 %v881, 0.0
        %v1215 = vmax.f32 %v883, 0.0
        %v1216 = vmax.f32 %v1074, 0.0
        %v1217 = vmax.f32 %v1076, 0.0
        %v1218 = vmax.f32 %v887, 0.0
        %v1219 = vmax.f32 %v889, 0.0
        %v1220 = vmax.f32 %v1080, 0.0
        %v1221 = vmax.f32 %v1082, 0.0
        %v1222 = vmax.f32 %v891, 0.0
        %v1223 = vmax.f32 %v893, 0.0
        %v1224 = vmax.f32 %v1084, 0.0
        %v1225 = vmax.f32 %v1086, 0.0
        %v1226 = vmax.f32 %v897, 0.0
        %v1227 = vmax.f32 %v899, 0.0
        %v1228 = vmax.f32 %v1090, 0.0
        %v1229 = vmax.f32 %v1092, 0.0
        %v1230 = vmax.f32 %v901, 0.0
        %v1231 = vmax.f32 %v903, 0.0
        %v1232 = vmax.f32 %v1094, 0.0
        %v1233 = vmax.f32 %v1096, 0.0
        %v1234 = vmax.f32 %v907, 0.0
        %v1235 = vmax.f32 %v909, 0.0
        %v1236 = vmax.f32 %v1100, 0.0
        %v1237 = vmax.f32 %v1102, 0.0
        %v1238 = vmax.f32 %v911, 0.0
        %v1239 = vmax.f32 %v913, 0.0
        %v1240 = vmax.f32 %v1104, 0.0
        %v1241 = vmax.f32 %v1106, 0.0
        %v1242 = vmax.f32 %v917, 0.0
        %v1243 = vmax.f32 %v919, 0.0
        %v1244 = vmax.f32 %v1110, 0.0
        %v1245 = vmax.f32 %v1112, 0.0
        %v1246 = vmax.f32 %v921, 0.0
        %v1247 = vmax.f32 %v923, 0.0
        %v1248 = vmax.f32 %v1114, 0.0
        %v1249 = vmax.f32 %v1116, 0.0
        %v1250 = vmax.f32 %v927, 0.0
        %v1251 = vmax.f32 %v929, 0.0
        %v1252 = vmax.f32 %v1120, 0.0
        %v1253 = vmax.f32 %v1122, 0.0
        %v1254 = vmax.f32 %v931, 0.0
        %v1255 = vmax.f32 %v933, 0.0
        %v1256 = vmax.f32 %v1124, 0.0
        %v1257 = vmax.f32 %v1126, 0.0
        %v1258 = vmax.f32 %v937, 0.0
        %v1259 = vmax.f32 %v939, 0.0
        %v1260 = vmax.f32 %v1130, 0.0
        %v1261 = vmax.f32 %v1132, 0.0
        %v1262 = vmax.f32 %v941, 0.0
        %v1263 = vmax.f32 %v943, 0.0
        %v1264 = vmax.f32 %v1134, 0.0
        %v1265 = vmax.f32 %v1136, 0.0
        %1266 = vst [vmem:[%s232] sm:$0xff] %v1138
        %1267 = vst [vmem:[%s232 + $0x8] sm:$0xff] %v1139
        %1268 = vst [vmem:[%s232 + $0x10] sm:$0xff] %v1140
        %1269 = vst [vmem:[%s232 + $0x18] sm:$0xff] %v1141
        %1270 = vst [vmem:[%s232 + $0x20] sm:$0xff] %v1142
        %1271 = vst [vmem:[%s232 + $0x28] sm:$0xff] %v1143
        %1272 = vst [vmem:[%s232 + $0x30] sm:$0xff] %v1144
        %1273 = vst [vmem:[%s232 + $0x38] sm:$0xff] %v1145
        %1274 = vst [vmem:[%s232 + $0x40] sm:$0xff] %v1146
        %1275 = vst [vmem:[%s232 + $0x48] sm:$0xff] %v1147
        %1276 = vst [vmem:[%s232 + $0x50] sm:$0xff] %v1148
        %1277 = vst [vmem:[%s232 + $0x58] sm:$0xff] %v1149
        %1278 = vst [vmem:[%s232 + $0x60] sm:$0xff] %v1150
        %1279 = vst [vmem:[%s232 + $0x68] sm:$0xff] %v1151
        %1280 = vst [vmem:[%s232 + $0x70] sm:$0xff] %v1152
        %1281 = vst [vmem:[%s232 + $0x78] sm:$0xff] %v1153
        %1282 = vst [vmem:[%s232 + $0x80] sm:$0xff] %v1154
        %1283 = vst [vmem:[%s232 + $0x88] sm:$0xff] %v1155
        %1284 = vst [vmem:[%s232 + $0x90] sm:$0xff] %v1156
        %1285 = vst [vmem:[%s232 + $0x98] sm:$0xff] %v1157
        %1286 = vst [vmem:[%s232 + $0xa0] sm:$0xff] %v1158
        %1287 = vst [vmem:[%s232 + $0xa8] sm:$0xff] %v1159
        %1288 = vst [vmem:[%s232 + $0xb0] sm:$0xff] %v1160
        %1289 = vst [vmem:[%s232 + $0xb8] sm:$0xff] %v1161
        %1290 = vst [vmem:[%s232 + $0xc0] sm:$0xff] %v1162
        %1291 = vst [vmem:[%s232 + $0xc8] sm:$0xff] %v1163
        %1292 = vst [vmem:[%s232 + $0xd0] sm:$0xff] %v1164
        %1293 = vst [vmem:[%s232 + $0xd8] sm:$0xff] %v1165
        %1294 = vst [vmem:[%s232 + $0xe0] sm:$0xff] %v1166
        %1295 = vst [vmem:[%s232 + $0xe8] sm:$0xff] %v1167
        %1296 = vst [vmem:[%s232 + $0xf0] sm:$0xff] %v1168
        %1297 = vst [vmem:[%s232 + $0xf8] sm:$0xff] %v1169
        %1298 = vst [vmem:[%s232 + $0x100] sm:$0xff] %v1170
        %1299 = vst [vmem:[%s232 + $0x108] sm:$0xff] %v1171
        %1300 = vst [vmem:[%s232 + $0x110] sm:$0xff] %v1172
        %1301 = vst [vmem:[%s232 + $0x118] sm:$0xff] %v1173
        %1302 = vst [vmem:[%s232 + $0x120] sm:$0xff] %v1174
        %1303 = vst [vmem:[%s232 + $0x128] sm:$0xff] %v1175
        %1304 = vst [vmem:[%s232 + $0x130] sm:$0xff] %v1176
        %1305 = vst [vmem:[%s232 + $0x138] sm:$0xff] %v1177
        %1306 = vst [vmem:[%s232 + $0x140] sm:$0xff] %v1178
        %1307 = vst [vmem:[%s232 + $0x148] sm:$0xff] %v1179
        %1308 = vst [vmem:[%s232 + $0x150] sm:$0xff] %v1180
        %1309 = vst [vmem:[%s232 + $0x158] sm:$0xff] %v1181
        %1310 = vst [vmem:[%s232 + $0x160] sm:$0xff] %v1182
        %1311 = vst [vmem:[%s232 + $0x168] sm:$0xff] %v1183
        %1312 = vst [vmem:[%s232 + $0x170] sm:$0xff] %v1184
        %1313 = vst [vmem:[%s232 + $0x178] sm:$0xff] %v1185
        %1314 = vst [vmem:[%s232 + $0x180] sm:$0xff] %v1186
        %1315 = vst [vmem:[%s232 + $0x188] sm:$0xff] %v1187
        %1316 = vst [vmem:[%s232 + $0x190] sm:$0xff] %v1188
        %1317 = vst [vmem:[%s232 + $0x198] sm:$0xff] %v1189
        %1318 = vst [vmem:[%s232 + $0x1a0] sm:$0xff] %v1190
        %1319 = vst [vmem:[%s232 + $0x1a8] sm:$0xff] %v1191
        %1320 = vst [vmem:[%s232 + $0x1b0] sm:$0xff] %v1192
        %1321 = vst [vmem:[%s232 + $0x1b8] sm:$0xff] %v1193
        %1322 = vst [vmem:[%s232 + $0x1c0] sm:$0xff] %v1194
        %1323 = vst [vmem:[%s232 + $0x1c8] sm:$0xff] %v1195
        %1324 = vst [vmem:[%s232 + $0x1d0] sm:$0xff] %v1196
        %1325 = vst [vmem:[%s232 + $0x1d8] sm:$0xff] %v1197
        %1326 = vst [vmem:[%s232 + $0x1e0] sm:$0xff] %v1198
        %1327 = vst [vmem:[%s232 + $0x1e8] sm:$0xff] %v1199
        %1328 = vst [vmem:[%s232 + $0x1f0] sm:$0xff] %v1200
        %1329 = vst [vmem:[%s232 + $0x1f8] sm:$0xff] %v1201
        %1330 = vst [vmem:[%s232 + $0x200] sm:$0xff] %v1202
        %1331 = vst [vmem:[%s232 + $0x208] sm:$0xff] %v1203
        %1332 = vst [vmem:[%s232 + $0x210] sm:$0xff] %v1204
        %1333 = vst [vmem:[%s232 + $0x218] sm:$0xff] %v1205
        %1334 = vst [vmem:[%s232 + $0x220] sm:$0xff] %v1206
        %1335 = vst [vmem:[%s232 + $0x228] sm:$0xff] %v1207
        %1336 = vst [vmem:[%s232 + $0x230] sm:$0xff] %v1208
        %1337 = vst [vmem:[%s232 + $0x238] sm:$0xff] %v1209
        %1338 = vst [vmem:[%s232 + $0x240] sm:$0xff] %v1210
        %1339 = vst [vmem:[%s232 + $0x248] sm:$0xff] %v1211
        %1340 = vst [vmem:[%s232 + $0x250] sm:$0xff] %v1212
        %1341 = vst [vmem:[%s232 + $0x258] sm:$0xff] %v1213
        %1342 = vst [vmem:[%s232 + $0x260] sm:$0xff] %v1214
        %1343 = vst [vmem:[%s232 + $0x268] sm:$0xff] %v1215
        %1344 = vst [vmem:[%s232 + $0x270] sm:$0xff] %v1216
        %1345 = vst [vmem:[%s232 + $0x278] sm:$0xff] %v1217
        %1346 = vst [vmem:[%s232 + $0x280] sm:$0xff] %v1218
        %1347 = vst [vmem:[%s232 + $0x288] sm:$0xff] %v1219
        %1348 = vst [vmem:[%s232 + $0x290] sm:$0xff] %v1220
        %1349 = vst [vmem:[%s232 + $0x298] sm:$0xff] %v1221
        %1350 = vst [vmem:[%s232 + $0x2a0] sm:$0xff] %v1222
        %1351 = vst [vmem:[%s232 + $0x2a8] sm:$0xff] %v1223
        %1352 = vst [vmem:[%s232 + $0x2b0] sm:$0xff] %v1224
        %1353 = vst [vmem:[%s232 + $0x2b8] sm:$0xff] %v1225
        %1354 = vst [vmem:[%s232 + $0x2c0] sm:$0xff] %v1226
        %1355 = vst [vmem:[%s232 + $0x2c8] sm:$0xff] %v1227
        %1356 = vst [vmem:[%s232 + $0x2d0] sm:$0xff] %v1228
        %1357 = vst [vmem:[%s232 + $0x2d8] sm:$0xff] %v1229
        %1358 = vst [vmem:[%s232 + $0x2e0] sm:$0xff] %v1230
        %1359 = vst [vmem:[%s232 + $0x2e8] sm:$0xff] %v1231
        %1360 = vst [vmem:[%s232 + $0x2f0] sm:$0xff] %v1232
        %1361 = vst [vmem:[%s232 + $0x2f8] sm:$0xff] %v1233
        %1362 = vst [vmem:[%s232 + $0x300] sm:$0xff] %v1234
        %1363 = vst [vmem:[%s232 + $0x308] sm:$0xff] %v1235
        %1364 = vst [vmem:[%s232 + $0x310] sm:$0xff] %v1236
        %1365 = vst [vmem:[%s232 + $0x318] sm:$0xff] %v1237
        %1366 = vst [vmem:[%s232 + $0x320] sm:$0xff] %v1238
        %1367 = vst [vmem:[%s232 + $0x328] sm:$0xff] %v1239
        %1368 = vst [vmem:[%s232 + $0x330] sm:$0xff] %v1240
        %1369 = vst [vmem:[%s232 + $0x338] sm:$0xff] %v1241
        %1370 = vst [vmem:[%s232 + $0x340] sm:$0xff] %v1242
        %1371 = vst [vmem:[%s232 + $0x348] sm:$0xff] %v1243
        %1372 = vst [vmem:[%s232 + $0x350] sm:$0xff] %v1244
        %1373 = vst [vmem:[%s232 + $0x358] sm:$0xff] %v1245
        %1374 = vst [vmem:[%s232 + $0x360] sm:$0xff] %v1246
        %1375 = vst [vmem:[%s232 + $0x368] sm:$0xff] %v1247
        %1376 = vst [vmem:[%s232 + $0x370] sm:$0xff] %v1248
        %1377 = vst [vmem:[%s232 + $0x378] sm:$0xff] %v1249
        %1378 = vst [vmem:[%s232 + $0x380] sm:$0xff] %v1250
        %1379 = vst [vmem:[%s232 + $0x388] sm:$0xff] %v1251
        %1380 = vst [vmem:[%s232 + $0x390] sm:$0xff] %v1252
        %1381 = vst [vmem:[%s232 + $0x398] sm:$0xff] %v1253
        %1382 = vst [vmem:[%s232 + $0x3a0] sm:$0xff] %v1254
        %1383 = vst [vmem:[%s232 + $0x3a8] sm:$0xff] %v1255
        %1384 = vst [vmem:[%s232 + $0x3b0] sm:$0xff] %v1256
        %1385 = vst [vmem:[%s232 + $0x3b8] sm:$0xff] %v1257
        %1386 = vst [vmem:[%s232 + $0x3c0] sm:$0xff] %v1258
        %1387 = vst [vmem:[%s232 + $0x3c8] sm:$0xff] %v1259
        %1388 = vst [vmem:[%s232 + $0x3d0] sm:$0xff] %v1260
        %1389 = vst [vmem:[%s232 + $0x3d8] sm:$0xff] %v1261
        %1390 = vst [vmem:[%s232 + $0x3e0] sm:$0xff] %v1262
        %1391 = vst [vmem:[%s232 + $0x3e8] sm:$0xff] %v1263
        %1392 = vst [vmem:[%s232 + $0x3f0] sm:$0xff] %v1264
        %1393 = vst [vmem:[%s232 + $0x3f8] sm:$0xff] %v1265
        %s1394 = sand.u32 %s120, 1
        %s1395 = scalar_lea.sflag [#allocation4], %s1394
        %s1396 = sand.u32 %s120, 1
        %s1397 = smul.addr %s1396, 1024
        %s1398 = scalar_lea.vmem [#allocation5], %s1397
        // Predicated region
        $region37: #{tpu_custom_call.1} parent=31 // pred_check
          %p1399 = pneg %p130
        $region38: #{tpu_custom_call.1} parent=31 // pred_check_branch
          %1401 = sbr.rel (%p1399) target = $region40
        $region39: #{tpu_custom_call.1} parent=31 // pred_region
          %s1402 = smul.u32 32, %s24
          %s1403 = smul.u32 4, %s25
          %s1405 = ssub.s32 16384, 16384
          %1406 = vsyncadd %s1395, %s1405
          %s1407 = smul.addr %s1402, 8
          %s1408 = sadd.s32 %s1403, %s1407
          %s1409 = smul.addr %s1408, 128
          %s1410 = scalar_lea.hbm %s3, %s1409
          %s1411 = sshll.u32 %s1398, 4
          %s1412 = int_to_ptr.vmem [resolvable:$true] %s1411
          %1417 = dma.vmem_to_hbm [thread:$0]  %s1412, 16384, %s1410, %s1395, 512, 1024, 32
        $region40: #{tpu_custom_call.1} parent=31 // pred_fallthru
          _
      $region32: #{tpu_custom_call.1} parent=5 // pred_fallthru
        _
      %p1418 = scmp.le.s32.totalorder 2, %s15
      // Predicated region
      $region41: #{tpu_custom_call.1} parent=5 // pred_check
        %p1419 = pneg %p1418
      $region42: #{tpu_custom_call.1} parent=5 // pred_check_branch
        %1421 = sbr.rel (%p1419) target = $region44
      $region43: #{tpu_custom_call.1} parent=5 // pred_region
        %s1422 = ssub.s32 %s15, 2
        // Predicated region
        $region45: #{tpu_custom_call.1} parent=43 // pred_check
          %p1423 = pneg %p136
        $region46: #{tpu_custom_call.1} parent=43 // pred_check_branch
          %1425 = sbr.rel (%p1423) target = $region48
        $region47: #{tpu_custom_call.1} parent=43 // pred_region
          %s1426 = sand.u32 %s121, 1
          %s1427 = scalar_lea.sflag [#allocation4], %s1426
          %s1428 = sand.u32 %s121, 1
          %s1429 = smul.addr %s1428, 1024
          %s1430 = scalar_lea.vmem [#allocation5], %s1429
          %1431 = dma.done %s1427, 16384
        $region48: #{tpu_custom_call.1} parent=43 // pred_fallthru
          _
      $region44: #{tpu_custom_call.1} parent=5 // pred_fallthru
        _
    $region6: #{tpu_custom_call.1} parent=1 // loop_footer
      %s19 = sadd.s32 1, %s15
    $region7: #{tpu_custom_call.1} parent=1 // loop_footer_branch
      %14 = sbr.rel target = $region3
    $region8: #{tpu_custom_call.1} parent=1 // loop_exit
      _
    %1432 = vsyncpa [#allocation3], 1
    %s1433 = scalar_lea.sflag [#allocation3], 1
    %1434 = vsyncpa %s1433, 1
    %1435 = vsyncpa [#allocation4], 1
    %s1436 = scalar_lea.sflag [#allocation4], 1
    %1437 = vsyncpa %s1436, 1

</llo_original>
